<compile_context>
chip_gen: v6e
topology: v6e:2x2x1
jax: 0.10.0
libtpu: 0.0.40
codegen_flags: <defaults>
</compile_context>

<pallas_src>
import jax
import jax.numpy as jnp
from jax.experimental import pallas as pl
from jax.experimental.pallas import tpu as pltpu


# ---------------------------------------------------------------------------
# Path A: small vocab -> token table resident in VMEM, in-VMEM gather.
# ---------------------------------------------------------------------------
def _embedding_vmem_kernel(ids_ref, tok_ref, pos_ref, out_ref, gather_buf):
    """One grid step handles `rows` consecutive tokens of one batch row.

    ids_ref   : SMEM [B*T] int32   (scalar prefetch)
    tok_ref   : VMEM [V, E]        full table, resident (constant index_map)
    pos_ref   : VMEM [rows, E]     positional rows for this sequence tile
    out_ref   : VMEM [rows, E]     output tile (batch dim squeezed)
    gather_buf: VMEM [rows, E]     staging so the epilogue add is one dense op
    """
    b = pl.program_id(0)
    t = pl.program_id(1)
    rows = out_ref.shape[0]
    seq_len = pl.num_programs(1) * rows
    base = b * seq_len + t * rows

    # Static unroll: one dynamic-sublane read from the resident table per token.
    for r in range(rows):
        tok = ids_ref[base + r]
        gather_buf[pl.ds(r, 1), :] = tok_ref[pl.ds(tok, 1), :]

    out_ref[...] = (gather_buf[...] + pos_ref[...]).astype(out_ref.dtype)


# ---------------------------------------------------------------------------
# Path B: large vocab -> token table stays in HBM, row-wise DMA gather.
# ---------------------------------------------------------------------------
def _embedding_hbm_kernel(ids_ref, tok_hbm_ref, pos_ref, out_ref,
                          gather_buf, gather_sem):
    """Same tile decomposition as Path A, but gathers rows straight from HBM.

    tok_hbm_ref: HBM [V, E] (raw ref, manual DMA)
    gather_sem : DMA semaphores (rows,)
    """
    b = pl.program_id(0)
    t = pl.program_id(1)
    rows = gather_buf.shape[0]
    seq_len = pl.num_programs(1) * rows
    base = b * seq_len + t * rows

    # Issue every row DMA first so they are all in flight, then wait.
    copies = []
    for r in range(rows):
        tok = ids_ref[base + r]
        cp = pltpu.make_async_copy(
            tok_hbm_ref.at[tok], gather_buf.at[r], gather_sem.at[r]
        )
        cp.start()
        copies.append(cp)
    for cp in copies:
        cp.wait()

    out_ref[...] = (gather_buf[...] + pos_ref[...]).astype(out_ref.dtype)


def _pick_rows_per_tile(seq_len, max_rows=256):
    """Largest multiple-of-8 divisor of seq_len (<= max_rows); else whole seq."""
    best = None
    r = 8
    while r <= min(seq_len, max_rows):
        if seq_len % r == 0:
            best = r
        r += 8
    return best if best is not None else seq_len


# Conservative: even double-buffered the table stays far below the default
# scoped-VMEM limit on v5e/v6e/v7x, leaving room for the pipelined tiles.
_VMEM_TABLE_BUDGET_BYTES = 4 * 1024 * 1024


def embedding_forward(ids, token_tbl, pos_tbl, *, max_rows_per_tile=256,
                      vmem_table_budget_bytes=_VMEM_TABLE_BUDGET_BYTES):
    B, T = ids.shape
    V, E = token_tbl.shape
    C, E2 = pos_tbl.shape
    assert E == E2, "embedding dims must match"
    assert T <= C, "sequence length must not exceed context_length"

    rows = _pick_rows_per_tile(T, max_rows_per_tile)
    n_seq_tiles = T // rows

    # TODO(synk): PyTorch nn.Embedding raises on out-of-range ids; we clamp
    # instead so a bad id cannot trigger an unchecked OOB gather/DMA.
    flat_ids = jnp.clip(ids.reshape(-1), 0, V - 1).astype(jnp.int32)

    table_bytes = V * E * jnp.dtype(token_tbl.dtype).itemsize
    use_vmem_table = table_bytes <= vmem_table_budget_bytes

    pos_spec = pl.BlockSpec((rows, E), lambda b, t, ids_ref: (t, 0))
    out_spec = pl.BlockSpec((None, rows, E), lambda b, t, ids_ref: (b, t, 0))

    if use_vmem_table:
        kernel = _embedding_vmem_kernel
        tok_spec = pl.BlockSpec((V, E), lambda b, t, ids_ref: (0, 0))  # resident
        scratch = [pltpu.VMEM((rows, E), token_tbl.dtype)]
    else:
        kernel = _embedding_hbm_kernel
        tok_spec = pl.BlockSpec(memory_space=pl.ANY)  # raw HBM ref, manual DMA
        scratch = [
            pltpu.VMEM((rows, E), token_tbl.dtype),
            pltpu.SemaphoreType.DMA((rows,)),
        ]

    grid_spec = pltpu.PrefetchScalarGridSpec(
        num_scalar_prefetch=1,
        grid=(B, n_seq_tiles),
        in_specs=[tok_spec, pos_spec],
        out_specs=out_spec,
        scratch_shapes=scratch,
    )

    return pl.pallas_call(
        kernel,
        out_shape=jax.ShapeDtypeStruct((B, T, E), token_tbl.dtype),
        grid_spec=grid_spec,
        compiler_params=pltpu.CompilerParams(
            dimension_semantics=("parallel", "parallel"),
        ),
    )(flat_ids, token_tbl, pos_tbl)


if __name__ == "__main__":
    # Small shapes consistent with the module.
    batch = 2
    seq = 8             # sequence length T (<= context_length)
    emb_size = 32
    vocab_size = 64
    context_length = 16

    key = jax.random.PRNGKey(0)
    k_tok, k_pos, k_ids = jax.random.split(key, 3)

    # nn.Embedding default init: N(0, 1).
    token_tbl = jax.random.normal(k_tok, (vocab_size, emb_size), dtype=jnp.float32)
    pos_tbl = jax.random.normal(k_pos, (context_length, emb_size), dtype=jnp.float32)
    ids = jax.random.randint(k_ids, (batch, seq), 0, vocab_size, dtype=jnp.int32)

    # Pure-JAX reference.
    ref = token_tbl[ids] + pos_tbl[jnp.arange(seq)][None, :, :]

    # Path A: VMEM-resident table (default for this small vocab).
    out_vmem = jax.block_until_ready(embedding_forward(ids, token_tbl, pos_tbl))
    assert out_vmem.shape == (batch, seq, emb_size)
    assert jnp.allclose(out_vmem, ref, atol=1e-5, rtol=1e-5), "VMEM path mismatch"

    # Path B: force the HBM DMA-gather path (used for large vocabularies).
    out_hbm = jax.block_until_ready(
        embedding_forward(ids, token_tbl, pos_tbl, vmem_table_budget_bytes=0)
    )
    assert jnp.allclose(out_hbm, ref, atol=1e-5, rtol=1e-5), "HBM path mismatch"

    print("KERNEL_OK")
</pallas_src>

<mosaic_0001>
module attributes {stable_mosaic.version = 11 : i64} {
  func.func @_embedding_vmem_kernel(%arg0: i32, %arg1: i32, %arg2: memref<16xi32, #tpu.memory_space<smem>>, %arg3: memref<64x32xf32, #tpu.memory_space<vmem>>, %arg4: memref<8x32xf32, #tpu.memory_space<vmem>>, %arg5: memref<1x8x32xf32, #tpu.memory_space<vmem>>, %arg6: memref<8x32xf32, #tpu.memory_space<vmem>>) attributes {dimension_semantics = [#tpu.dimension_semantics<parallel>, #tpu.dimension_semantics<parallel>], iteration_bounds = array<i64: 2, 1>, scalar_prefetch = 1 : i64, scratch_operands = 1 : i64, tpu.core_type = #tpu.core_type<tc>, window_params = [{pipeline_mode = #tpu.pipeline_mode<synchronous>, transform_indices = @transform_0, window_bounds = array<i64: 64, 32>}, {transform_indices = @transform_1, window_bounds = array<i64: 8, 32>}, {transform_indices = @transform_2, window_bounds = array<i64: 1, 8, 32>}]} {
    %c8_i32 = arith.constant 8 : i32
    %0 = arith.muli %arg0, %c8_i32 : i32
    %c8_i32_0 = arith.constant 8 : i32
    %1 = arith.muli %arg1, %c8_i32_0 : i32
    %2 = arith.addi %0, %1 : i32
    %c0_i32 = arith.constant 0 : i32
    %3 = arith.addi %2, %c0_i32 : i32
    %4 = arith.index_cast %3 : i32 to index
    %5 = memref.load %arg2[%4] : memref<16xi32, #tpu.memory_space<smem>>
    %6 = arith.index_cast %5 : i32 to index
    %c0 = arith.constant 0 : index
    %7 = vector.load %arg3[%6, %c0] : memref<64x32xf32, #tpu.memory_space<vmem>>, vector<1x32xf32>
    %c0_1 = arith.constant 0 : index
    %c0_2 = arith.constant 0 : index
    %8 = vector.load %arg6[%c0_1, %c0_2] : memref<8x32xf32, #tpu.memory_space<vmem>>, vector<1x32xf32>
    tpu.vector_store %arg6[%c0_1, %c0_2], %7 {strides = array<i32>} : memref<8x32xf32, #tpu.memory_space<vmem>>, vector<1x32xf32>,
    %c1_i32 = arith.constant 1 : i32
    %9 = arith.addi %2, %c1_i32 : i32
    %10 = arith.index_cast %9 : i32 to index
    %11 = memref.load %arg2[%10] : memref<16xi32, #tpu.memory_space<smem>>
    %12 = arith.index_cast %11 : i32 to index
    %c0_3 = arith.constant 0 : index
    %13 = vector.load %arg3[%12, %c0_3] : memref<64x32xf32, #tpu.memory_space<vmem>>, vector<1x32xf32>
    %c1 = arith.constant 1 : index
    %c0_4 = arith.constant 0 : index
    %14 = vector.load %arg6[%c1, %c0_4] : memref<8x32xf32, #tpu.memory_space<vmem>>, vector<1x32xf32>
    tpu.vector_store %arg6[%c1, %c0_4], %13 {strides = array<i32>} : memref<8x32xf32, #tpu.memory_space<vmem>>, vector<1x32xf32>,
    %c2_i32 = arith.constant 2 : i32
    %15 = arith.addi %2, %c2_i32 : i32
    %16 = arith.index_cast %15 : i32 to index
    %17 = memref.load %arg2[%16] : memref<16xi32, #tpu.memory_space<smem>>
    %18 = arith.index_cast %17 : i32 to index
    %c0_5 = arith.constant 0 : index
    %19 = vector.load %arg3[%18, %c0_5] : memref<64x32xf32, #tpu.memory_space<vmem>>, vector<1x32xf32>
    %c2 = arith.constant 2 : index
    %c0_6 = arith.constant 0 : index
    %20 = vector.load %arg6[%c2, %c0_6] : memref<8x32xf32, #tpu.memory_space<vmem>>, vector<1x32xf32>
    tpu.vector_store %arg6[%c2, %c0_6], %19 {strides = array<i32>} : memref<8x32xf32, #tpu.memory_space<vmem>>, vector<1x32xf32>,
    %c3_i32 = arith.constant 3 : i32
    %21 = arith.addi %2, %c3_i32 : i32
    %22 = arith.index_cast %21 : i32 to index
    %23 = memref.load %arg2[%22] : memref<16xi32, #tpu.memory_space<smem>>
    %24 = arith.index_cast %23 : i32 to index
    %c0_7 = arith.constant 0 : index
    %25 = vector.load %arg3[%24, %c0_7] : memref<64x32xf32, #tpu.memory_space<vmem>>, vector<1x32xf32>
    %c3 = arith.constant 3 : index
    %c0_8 = arith.constant 0 : index
    %26 = vector.load %arg6[%c3, %c0_8] : memref<8x32xf32, #tpu.memory_space<vmem>>, vector<1x32xf32>
    tpu.vector_store %arg6[%c3, %c0_8], %25 {strides = array<i32>} : memref<8x32xf32, #tpu.memory_space<vmem>>, vector<1x32xf32>,
    %c4_i32 = arith.constant 4 : i32
    %27 = arith.addi %2, %c4_i32 : i32
    %28 = arith.index_cast %27 : i32 to index
    %29 = memref.load %arg2[%28] : memref<16xi32, #tpu.memory_space<smem>>
    %30 = arith.index_cast %29 : i32 to index
    %c0_9 = arith.constant 0 : index
    %31 = vector.load %arg3[%30, %c0_9] : memref<64x32xf32, #tpu.memory_space<vmem>>, vector<1x32xf32>
    %c4 = arith.constant 4 : index
    %c0_10 = arith.constant 0 : index
    %32 = vector.load %arg6[%c4, %c0_10] : memref<8x32xf32, #tpu.memory_space<vmem>>, vector<1x32xf32>
    tpu.vector_store %arg6[%c4, %c0_10], %31 {strides = array<i32>} : memref<8x32xf32, #tpu.memory_space<vmem>>, vector<1x32xf32>,
    %c5_i32 = arith.constant 5 : i32
    %33 = arith.addi %2, %c5_i32 : i32
    %34 = arith.index_cast %33 : i32 to index
    %35 = memref.load %arg2[%34] : memref<16xi32, #tpu.memory_space<smem>>
    %36 = arith.index_cast %35 : i32 to index
    %c0_11 = arith.constant 0 : index
    %37 = vector.load %arg3[%36, %c0_11] : memref<64x32xf32, #tpu.memory_space<vmem>>, vector<1x32xf32>
    %c5 = arith.constant 5 : index
    %c0_12 = arith.constant 0 : index
    %38 = vector.load %arg6[%c5, %c0_12] : memref<8x32xf32, #tpu.memory_space<vmem>>, vector<1x32xf32>
    tpu.vector_store %arg6[%c5, %c0_12], %37 {strides = array<i32>} : memref<8x32xf32, #tpu.memory_space<vmem>>, vector<1x32xf32>,
    %c6_i32 = arith.constant 6 : i32
    %39 = arith.addi %2, %c6_i32 : i32
    %40 = arith.index_cast %39 : i32 to index
    %41 = memref.load %arg2[%40] : memref<16xi32, #tpu.memory_space<smem>>
    %42 = arith.index_cast %41 : i32 to index
    %c0_13 = arith.constant 0 : index
    %43 = vector.load %arg3[%42, %c0_13] : memref<64x32xf32, #tpu.memory_space<vmem>>, vector<1x32xf32>
    %c6 = arith.constant 6 : index
    %c0_14 = arith.constant 0 : index
    %44 = vector.load %arg6[%c6, %c0_14] : memref<8x32xf32, #tpu.memory_space<vmem>>, vector<1x32xf32>
    tpu.vector_store %arg6[%c6, %c0_14], %43 {strides = array<i32>} : memref<8x32xf32, #tpu.memory_space<vmem>>, vector<1x32xf32>,
    %c7_i32 = arith.constant 7 : i32
    %45 = arith.addi %2, %c7_i32 : i32
    %46 = arith.index_cast %45 : i32 to index
    %47 = memref.load %arg2[%46] : memref<16xi32, #tpu.memory_space<smem>>
    %48 = arith.index_cast %47 : i32 to index
    %c0_15 = arith.constant 0 : index
    %49 = vector.load %arg3[%48, %c0_15] : memref<64x32xf32, #tpu.memory_space<vmem>>, vector<1x32xf32>
    %c7 = arith.constant 7 : index
    %c0_16 = arith.constant 0 : index
    %50 = vector.load %arg6[%c7, %c0_16] : memref<8x32xf32, #tpu.memory_space<vmem>>, vector<1x32xf32>
    tpu.vector_store %arg6[%c7, %c0_16], %49 {strides = array<i32>} : memref<8x32xf32, #tpu.memory_space<vmem>>, vector<1x32xf32>,
    %c0_17 = arith.constant 0 : index
    %c0_18 = arith.constant 0 : index
    %51 = vector.load %arg6[%c0_17, %c0_18] : memref<8x32xf32, #tpu.memory_space<vmem>>, vector<8x32xf32>
    %c0_19 = arith.constant 0 : index
    %c0_20 = arith.constant 0 : index
    %52 = vector.load %arg4[%c0_19, %c0_20] : memref<8x32xf32, #tpu.memory_space<vmem>>, vector<8x32xf32>
    %53 = arith.addf %51, %52 : vector<8x32xf32>
    %c0_21 = arith.constant 0 : index
    %c0_22 = arith.constant 0 : index
    %c0_23 = arith.constant 0 : index
    %54 = vector.load %arg5[%c0_21, %c0_22, %c0_23] : memref<1x8x32xf32, #tpu.memory_space<vmem>>, vector<1x8x32xf32>
    %55 = vector.shape_cast %54 : vector<1x8x32xf32> to vector<8x32xf32>
    %56 = vector.shape_cast %53 : vector<8x32xf32> to vector<1x8x32xf32>
    tpu.vector_store %arg5[%c0_21, %c0_22, %c0_23], %56 {strides = array<i32>} : memref<1x8x32xf32, #tpu.memory_space<vmem>>, vector<1x8x32xf32>,
    return
  }
  func.func @transform_0(%arg0: i32, %arg1: i32, %arg2: memref<16xi32, #tpu.memory_space<smem>>) -> (i32, i32) {
    %c0_i32 = arith.constant 0 : i32
    %c0_i32_0 = arith.constant 0 : i32
    %c0_i32_1 = arith.constant 0 : i32
    return %c0_i32, %c0_i32_0 : i32, i32
  }
  func.func @transform_1(%arg0: i32, %arg1: i32, %arg2: memref<16xi32, #tpu.memory_space<smem>>) -> (i32, i32) {
    %c0_i32 = arith.constant 0 : i32
    %c0_i32_0 = arith.constant 0 : i32
    return %arg1, %c0_i32 : i32, i32
  }
  func.func @transform_2(%arg0: i32, %arg1: i32, %arg2: memref<16xi32, #tpu.memory_space<smem>>) -> (i32, i32, i32) {
    %c0_i32 = arith.constant 0 : i32
    %c0_i32_0 = arith.constant 0 : i32
    return %arg0, %arg1, %c0_i32 : i32, i32, i32
  }
}

</mosaic_0001>

<llo_original>
// kernel: tpu_custom_call.1
$region0: #{tpu_custom_call.1}
  #allocation0 [shape = 'u32[]', space=smem, size = 0x4, offset = 0x4, fixed_abs, tag = 'smem constant byte address 0x4 - core index']
  #allocation1 [shape = 'u32[144,128]{1,0:T(1,128)}', space=vmem, size = 0x12000, scoped, tag = 'internal scratch']
  #allocation2 [shape = 'f32[8,32]{1,0:T(8,128)}', space=vmem, size = 0x1000, scoped, tag = 'scratch operand']
  #allocation3 [shape = 's32[1]{0}', space=sflag, size = 0x4, scoped, tag = 'scoped memory for tpu_custom_call.1']
  #allocation4 [shape = 'u8[512]{0}', space=smem, size = 0x200, scoped, tag = 'prefetched SMEM operand 0']
  %s0 = inlined_call_operand.vmem [shape: s32[16], index: 0, kind: input, shape index: {}]
  %s1 = inlined_call_operand.vmem [shape: f32[64,32], index: 1, kind: input, shape index: {}]
  %s2 = inlined_call_operand.vmem [shape: f32[16,32], index: 2, kind: input, shape index: {}]
  %s3 = inlined_call_operand.hbm [shape: f32[2,8,32], index: 3, kind: output, shape index: {}]
  %s4 = sld [smem:[#allocation0]]
  $region41: #{tpu_custom_call.1} parent=0
    _
  %s6 = ssub.s32 1, %s4
  %s7 = scalar_select 0, %s6, %s4
  %s8 = sshll.u32 %s0, 4
  %s9 = int_to_ptr.vmem [resolvable:$true] %s8
  %11 = dma.vmem_to_smem %s9, 16, [#allocation4], [#allocation3]
  %12 = dma.done [#allocation3], 16
  %13 = sfence
  $region1: #{tpu_custom_call.1} parent=0
    #allocation5 [shape = 'u8[8192]{0}', space=vmem, size = 0x2000, scoped, tag = 'output window, operand 0']
    #allocation6 [shape = 's32[2]{0}', space=sflag, size = 0x8, scoped, tag = 'scoped memory for tpu_custom_call.1']
    %14 = vsyncpa [#allocation6], 0
    %s15 = scalar_lea.sflag [#allocation6], 1
    %16 = vsyncpa %s15, 0
    loop: start=0, step=1, limit=4
    $region2: #{tpu_custom_call.1} parent=1 // loop_pre_header
      _
    $region3: #{tpu_custom_call.1} parent=1 // loop_header
      %s18 = sphi 0, %s22
      %p19 = scmp.ge.s32.totalorder %s18, 4
      %s25 = sphi 0, %s37
      %s26 = sphi 0, %s33
      %s27 = sphi 0, %s25
      %s28 = sphi 0, %s26
      %s29 = sphi 0, %s27
      %s30 = sphi 0, %s28
      %s38 = sphi 0, %s38
      %s40 = sphi 0, %s38
      %s41 = sphi 0, %s40
      %s55 = sphi 0, %s41
      %s61 = sphi 0, %s63
      %s64 = sphi 0, %s61
      %s65 = sphi 0, %s64
      %s81 = sphi 0, %s65
      %s89 = sphi 0, %s91
      %s92 = sphi 0, %s89
      %s93 = sphi 0, %s92
      %s109 = sphi 0, %s93
    $region4: #{tpu_custom_call.1} parent=1 // loop_header_branch
      %21 = sbr.rel (%p19) target = $region8
    $region5: #{tpu_custom_call.1} parent=1 // loop_body
      %s23 = ssub.s32 %s18, 1
      %s24 = ssub.s32 %s18, 2
      %s31 = sadd.s32 1, %s26
      %p32 = scmp.ge.s32.totalorder %s31, 1
      %s33 = scalar_select %p32, 0, %s31
      %s34 = sadd.s32 1, %s25
      %s35 = scalar_select %p32, %s34, %s25
      %p36 = scmp.ge.s32.totalorder %s35, 2
      %s37 = scalar_select %p36, 0, %s35
      %s39 = sadd.s32 %s38, 1
      %p42 = scmp.eq.s32.totalorder %s18, 1
      %p43 = scmp.ne.s32.totalorder %s38, %s40
      %p44 = scmp.eq.s32.totalorder %s18, 0
      %p45 = por %p43, %p44
      %p46 = scmp.ne.s32.totalorder %s38, %s40
      %p47 = scmp.eq.s32.totalorder %s23, 1
      %p48 = por %p46, %p47
      %p49 = scmp.ne.s32.totalorder %s40, %s41
      %p50 = scmp.eq.s32.totalorder %s23, 0
      %p51 = por %p49, %p50
      %p52 = scmp.ne.s32.totalorder %s40, %s41
      %p53 = scmp.eq.s32.totalorder %s24, 1
      %p54 = por %p52, %p53
      %p56 = scmp.ne.s32.totalorder %s41, %s55
      %p57 = scmp.eq.s32.totalorder %s24, 0
      %p58 = por %p56, %p57
      %s59 = ssub.s32 %s26, %s33
      %p60 = scmp.eq.s32.totalorder %s59, 0
      %s62 = sadd.s32 %s61, 1
      %s63 = scalar_select %p60, %s61, %s62
      %p66 = pneg %p60
      %p67 = scmp.eq.s32.totalorder %s18, 1
      %p68 = por %p66, %p67
      %p69 = scmp.ne.s32.totalorder %s61, %s64
      %p70 = scmp.eq.s32.totalorder %s18, 0
      %p71 = por %p69, %p70
      %p72 = scmp.ne.s32.totalorder %s61, %s64
      %p73 = scmp.eq.s32.totalorder %s23, 1
      %p74 = por %p72, %p73
      %p75 = scmp.ne.s32.totalorder %s64, %s65
      %p76 = scmp.eq.s32.totalorder %s23, 0
      %p77 = por %p75, %p76
      %p78 = scmp.ne.s32.totalorder %s64, %s65
      %p79 = scmp.eq.s32.totalorder %s24, 1
      %p80 = por %p78, %p79
      %p82 = scmp.ne.s32.totalorder %s65, %s81
      %p83 = scmp.eq.s32.totalorder %s24, 0
      %p84 = por %p82, %p83
      %s85 = ssub.s32 %s25, %s37
      %s86 = ssub.s32 %s26, %s33
      %s87 = sor.u32 %s85, %s86
      %p88 = scmp.eq.s32.totalorder %s87, 0
      %s90 = sadd.s32 %s89, 1
      %s91 = scalar_select %p88, %s89, %s90
      %p94 = pneg %p88
      %p95 = scmp.eq.s32.totalorder %s18, 1
      %p96 = por %p94, %p95
      %p97 = scmp.ne.s32.totalorder %s89, %s92
      %p98 = scmp.eq.s32.totalorder %s18, 0
      %p99 = por %p97, %p98
      %p100 = scmp.ne.s32.totalorder %s89, %s92
      %p101 = scmp.eq.s32.totalorder %s23, 1
      %p102 = por %p100, %p101
      %p103 = scmp.ne.s32.totalorder %s92, %s93
      %p104 = scmp.eq.s32.totalorder %s23, 0
      %p105 = por %p103, %p104
      %p106 = scmp.ne.s32.totalorder %s92, %s93
      %p107 = scmp.eq.s32.totalorder %s24, 1
      %p108 = por %p106, %p107
      %p110 = scmp.ne.s32.totalorder %s93, %s109
      %p111 = scmp.eq.s32.totalorder %s24, 0
      %p112 = por %p110, %p111
      %p113 = scmp.le.s32.totalorder 1, %s18
      %p114 = scmp.lt.s32.totalorder %s18, 3
      %p115 = pnand %p113, %p114
      %p116 = pneg %p115
      // Predicated region
      $region9: #{tpu_custom_call.1} parent=5 // pred_check
        _
      $region10: #{tpu_custom_call.1} parent=5 // pred_check_branch
        %118 = sbr.rel (%p115) target = $region12
      $region11: #{tpu_custom_call.1} parent=5 // pred_region
        %s119 = ssub.s32 %s18, 1
        // Predicated region
        $region13: #{tpu_custom_call.1} parent=11 // pred_check
          %p120 = pneg %p51
        $region14: #{tpu_custom_call.1} parent=11 // pred_check_branch
          %122 = sbr.rel (%p120) target = $region16
        $region15: #{tpu_custom_call.1} parent=11 // pred_region
          _
        $region16: #{tpu_custom_call.1} parent=11 // pred_fallthru
          _
        // Predicated region
        $region17: #{tpu_custom_call.1} parent=11 // pred_check
          %p123 = pneg %p77
        $region18: #{tpu_custom_call.1} parent=11 // pred_check_branch
          %125 = sbr.rel (%p123) target = $region20
        $region19: #{tpu_custom_call.1} parent=11 // pred_region
          %p126 = scmp.lt.s32.totalorder %s28, 1
          %s127 = scalar_select %p126, %s28, 1
          %s128 = smul.addr %s127, 8
          %s129 = scalar_lea.vmem %s2, %s128
        $region20: #{tpu_custom_call.1} parent=11 // pred_fallthru
          _
      $region12: #{tpu_custom_call.1} parent=5 // pred_fallthru
        _
      %p130 = scmp.lt.s32.totalorder %s18, 2
      // Predicated region
      $region21: #{tpu_custom_call.1} parent=5 // pred_check
        %p131 = pneg %p130
      $region22: #{tpu_custom_call.1} parent=5 // pred_check_branch
        %133 = sbr.rel (%p131) target = $region24
      $region23: #{tpu_custom_call.1} parent=5 // pred_region
        _
      $region24: #{tpu_custom_call.1} parent=5 // pred_fallthru
        _
      %p134 = scmp.le.s32.totalorder 1, %s18
      %p135 = scmp.lt.s32.totalorder %s18, 3
      %p136 = pnand %p134, %p135
      %p137 = pneg %p136
      // Predicated region
      $region25: #{tpu_custom_call.1} parent=5 // pred_check
        _
      $region26: #{tpu_custom_call.1} parent=5 // pred_check_branch
        %139 = sbr.rel (%p136) target = $region28
      $region27: #{tpu_custom_call.1} parent=5 // pred_region
        %s140 = ssub.s32 %s18, 1
        %p141 = pneg %p51
        %p142 = pneg %p48
        %p143 = scmp.lt.s32.totalorder %s28, 1
        %s144 = scalar_select %p143, %s28, 1
        %s145 = smul.addr %s144, 8
        %s146 = scalar_lea.vmem %s2, %s145
        %p147 = pneg %p77
        %p148 = pneg %p74
        %p149 = pneg %p105
        %p150 = pneg %p102
        %s151 = sand.u32 %s92, 1
        %s152 = scalar_lea.sflag [#allocation6], %s151
        %s153 = sand.u32 %s92, 1
        %s154 = smul.addr %s153, 8
        %s155 = scalar_lea.vmem [#allocation5], %s154
        %p156 = scmp.lt.s32.totalorder %s28, 1
        %s157 = scalar_select %p156, %s28, 1
        %s158 = smul.addr %s157, 8
        %s159 = scalar_lea.vmem %s2, %s158
        %s160 = smul.u32 %s27, 8
        %s161 = smul.u32 %s28, 8
        %s162 = sadd.s32 %s160, %s161
        %s163 = sld [smem:[#allocation4 + %s162]]
        %s164 = scalar_lea.vmem %s1, %s163
        %v165 = vld [vmem:[%s164] sm:$0x1]
        %vm166 = vcmask 253952
        %167 = vst.msk [vmem:[#allocation2] sm:$0x1] %vm166, %v165
        %s168 = sadd.s32 %s162, 1
        %s169 = sld [smem:[#allocation4 + %s168]]
        %s170 = scalar_lea.vmem %s1, %s169
        %v171 = vld [vmem:[%s170] sm:$0x1]
        %172 = vst.msk [vmem:[#allocation2 + $0x1] sm:$0x1] %vm166, %v171
        %s173 = sadd.s32 %s162, 2
        %s174 = sld [smem:[#allocation4 + %s173]]
        %s175 = scalar_lea.vmem %s1, %s174
        %v176 = vld [vmem:[%s175] sm:$0x1]
        %177 = vst.msk [vmem:[#allocation2 + $0x2] sm:$0x1] %vm166, %v176
        %s178 = sadd.s32 %s162, 3
        %s179 = sld [smem:[#allocation4 + %s178]]
        %s180 = scalar_lea.vmem %s1, %s179
        %v181 = vld [vmem:[%s180] sm:$0x1]
        %182 = vst.msk [vmem:[#allocation2 + $0x3] sm:$0x1] %vm166, %v181
        %s183 = sadd.s32 %s162, 4
        %s184 = sld [smem:[#allocation4 + %s183]]
        %s185 = scalar_lea.vmem %s1, %s184
        %v186 = vld [vmem:[%s185] sm:$0x1]
        %187 = vst.msk [vmem:[#allocation2 + $0x4] sm:$0x1] %vm166, %v186
        %s188 = sadd.s32 %s162, 5
        %s189 = sld [smem:[#allocation4 + %s188]]
        %s190 = scalar_lea.vmem %s1, %s189
        %v191 = vld [vmem:[%s190] sm:$0x1]
        %192 = vst.msk [vmem:[#allocation2 + $0x5] sm:$0x1] %vm166, %v191
        %s193 = sadd.s32 %s162, 6
        %s194 = sld [smem:[#allocation4 + %s193]]
        %s195 = scalar_lea.vmem %s1, %s194
        %v196 = vld [vmem:[%s195] sm:$0x1]
        %197 = vst.msk [vmem:[#allocation2 + $0x6] sm:$0x1] %vm166, %v196
        %s198 = sadd.s32 %s162, 7
        %s199 = sld [smem:[#allocation4 + %s198]]
        %s200 = scalar_lea.vmem %s1, %s199
        %v201 = vld [vmem:[%s200] sm:$0x1]
        %202 = vst.msk [vmem:[#allocation2 + $0x7] sm:$0x1] %vm166, %v201
        %v203 = vld [vmem:[#allocation2] sm:$0xff]
        %v204 = vld [vmem:[%s159] sm:$0xff]
        %v205 = vadd.f32 %v203, %v204
        %vm206 = vcmask 261120
        %207 = vst.msk [vmem:[%s155] sm:$0xff] %vm206, %v205
        %s208 = sand.u32 %s92, 1
        %s209 = scalar_lea.sflag [#allocation6], %s208
        %s210 = sand.u32 %s92, 1
        %s211 = smul.addr %s210, 8
        %s212 = scalar_lea.vmem [#allocation5], %s211
        // Predicated region
        $region29: #{tpu_custom_call.1} parent=27 // pred_check
          %p213 = pneg %p102
        $region30: #{tpu_custom_call.1} parent=27 // pred_check_branch
          %215 = sbr.rel (%p213) target = $region32
        $region31: #{tpu_custom_call.1} parent=27 // pred_region
          %s217 = ssub.s32 128, 128
          %218 = vsyncadd %s209, %s217
          %s219 = sadd.s32 %s28, %s27
          %s220 = smul.addr %s219, 128
          %s221 = scalar_lea.hbm %s3, %s220
          %s223 = sshll.u32 %s212, 4
          %s224 = int_to_ptr.vmem [resolvable:$true] %s223
          %226 = dma.vmem_to_hbm [thread:$0]  %s224, 128, %s221, %s209
        $region32: #{tpu_custom_call.1} parent=27 // pred_fallthru
          _
      $region28: #{tpu_custom_call.1} parent=5 // pred_fallthru
        _
      %p227 = scmp.le.s32.totalorder 2, %s18
      // Predicated region
      $region33: #{tpu_custom_call.1} parent=5 // pred_check
        %p228 = pneg %p227
      $region34: #{tpu_custom_call.1} parent=5 // pred_check_branch
        %230 = sbr.rel (%p228) target = $region36
      $region35: #{tpu_custom_call.1} parent=5 // pred_region
        %s231 = ssub.s32 %s18, 2
        // Predicated region
        $region37: #{tpu_custom_call.1} parent=35 // pred_check
          %p232 = pneg %p108
        $region38: #{tpu_custom_call.1} parent=35 // pred_check_branch
          %234 = sbr.rel (%p232) target = $region40
        $region39: #{tpu_custom_call.1} parent=35 // pred_region
          %s235 = sand.u32 %s93, 1
          %s236 = scalar_lea.sflag [#allocation6], %s235
          %s237 = sand.u32 %s93, 1
          %s238 = smul.addr %s237, 8
          %s239 = scalar_lea.vmem [#allocation5], %s238
          %240 = dma.done %s236, 128
        $region40: #{tpu_custom_call.1} parent=35 // pred_fallthru
          _
      $region36: #{tpu_custom_call.1} parent=5 // pred_fallthru
        _
    $region6: #{tpu_custom_call.1} parent=1 // loop_footer
      %s22 = sadd.s32 1, %s18
    $region7: #{tpu_custom_call.1} parent=1 // loop_footer_branch
      %17 = sbr.rel target = $region3
    $region8: #{tpu_custom_call.1} parent=1 // loop_exit
      _
    %241 = vsyncpa [#allocation6], 1
    %s242 = scalar_lea.sflag [#allocation6], 1
    %243 = vsyncpa %s242, 1

</llo_original>
